<compile_context>
chip_gen: v5e
topology: v5e:2x2
jax: 0.10.0
libtpu: 0.0.40
codegen_flags: <defaults>
</compile_context>

<pallas_src>
import functools

import jax
import jax.numpy as jnp
from jax.experimental import pallas as pl
from jax.experimental.pallas import tpu as pltpu


def _route_func_kernel(x_ref, w_ref, b_ref, o_ref, acc_ref, *,
                       hw_eff, thw, hw_tiles, lane_chunk):
    # x_ref : (tn, C_eff, thw)  current spatial chunk (spatial on lanes)
    # w_ref : (C_eff, E)        fc weight, pre-transposed, pre-scaled, fold-repeated
    # b_ref : (1, E)            fc bias
    # o_ref : (tn, E)           routing weights (resident across the HW grid axis)
    # acc_ref: (tn, C_eff) f32  running spatial sum
    j = pl.program_id(1)

    @pl.when(j == 0)
    def _init():
        acc_ref[...] = jnp.zeros_like(acc_ref)

    def accumulate(limit):
        # Sum lanes [0, limit) of the current block in fixed sub-chunks so the
        # f32 temporary stays bounded (<= tn*C_eff*lane_chunk floats live).
        n_chunks = (limit + lane_chunk - 1) // lane_chunk
        if n_chunks <= 8:
            # Small number of chunks: fully static unrolled loop.
            for base in range(0, limit, lane_chunk):
                size = min(lane_chunk, limit - base)
                xc = x_ref[:, :, base:base + size].astype(jnp.float32)
                acc_ref[...] += jnp.sum(xc, axis=-1)
        else:
            # Many chunks (very large thw): rolled loop over full chunks plus a
            # static tail, to keep trace size and live ranges bounded.
            n_full = limit // lane_chunk

            def body(k, carry):
                base = pl.multiple_of(k * lane_chunk, lane_chunk)
                xc = x_ref[:, :, pl.ds(base, lane_chunk)].astype(jnp.float32)
                acc_ref[...] += jnp.sum(xc, axis=-1)
                return carry

            jax.lax.fori_loop(0, n_full, body, 0)
            rem_sz = limit - n_full * lane_chunk
            if rem_sz > 0:
                xc = x_ref[:, :, limit - rem_sz:limit].astype(jnp.float32)
                acc_ref[...] += jnp.sum(xc, axis=-1)

    # Valid lanes in the LAST spatial block (static).
    rem = hw_eff - (hw_tiles - 1) * thw
    if rem == thw:
        accumulate(thw)                      # exact tiling: no tail handling at all
    else:
        @pl.when(j < hw_tiles - 1)
        def _full_tiles():
            accumulate(thw)                  # plain unmasked adds

        @pl.when(j == hw_tiles - 1)
        def _ragged_tail():
            accumulate(rem)                  # static sub-slice, no runtime mask

    @pl.when(j == hw_tiles - 1)
    def _epilogue():
        # 1/(H*W) is folded into w (and the repeated rows absorb the sublane
        # fold), so acc @ w == mean_pool(x) @ W^T.
        logits = jnp.dot(acc_ref[...], w_ref[...].astype(jnp.float32),
                         preferred_element_type=jnp.float32)
        logits = logits + b_ref[...].astype(jnp.float32)
        o_ref[...] = jax.nn.sigmoid(logits).astype(o_ref.dtype)


def route_func_forward(x, w, b, *, row_tile=8, lane_chunk=512):
    """x: (N, C, H, W); w: (E, C) (PyTorch nn.Linear layout); b: (E,) -> (N, E)."""
    N, C, H, W = x.shape
    E = w.shape[0]
    HW = H * W
    itemsize = jnp.dtype(x.dtype).itemsize
    sub = max(8, 32 // itemsize)        # sublane granularity: f32->8, bf16->16, int8->32

    # --- sublane folding: (N, C, HW) -> (N, C*f, HW/f), contiguous & free -----
    fold = 1
    if C % sub != 0:
        for f in range(2, sub + 1):
            if (C * f) % sub == 0 and HW % f == 0:
                fold = f
                break
    c_eff = C * fold
    hw_eff = HW // fold
    x_flat = x.reshape(N, c_eff, hw_eff)

    # FC weight: (E, C) -> (C, E), fold 1/(H*W) in, repeat rows for the fold so
    # the epilogue matmul collapses the folded partial sums automatically.
    w_scaled = (w.astype(jnp.float32) * (1.0 / HW)).T           # (C, E)
    w_fold = jnp.repeat(w_scaled, fold, axis=0) if fold > 1 else w_scaled
    b2 = b.astype(jnp.float32).reshape(1, E)

    # --- row tile: multiple of 8 (or full N); keep >= 2 tiles when N >= 16 ----
    if N <= 8:
        tn = N
    else:
        tn = max(8, (min(row_tile, N) // 8) * 8)
        if N >= 16:
            tn = min(tn, max(8, ((N // 2) // 8) * 8))   # both v7x TCs stay busy

    # --- generation-aware VMEM budget -----------------------------------------
    try:
        vmem_cap = int(getattr(pltpu.get_tpu_info(), "vmem_capacity_bytes",
                               64 * 1024 * 1024))
    except Exception:
        vmem_cap = 64 * 1024 * 1024
    vmem_budget = int(vmem_cap * 3 // 4)         # ~48 MiB v7x, ~96 MiB v5e/v6e

    c_pad = ((c_eff + sub - 1) // sub) * sub
    # Double-buffered x blocks dominate; keep ~4 MiB for params/out/acc/scratch.
    x_budget = max(2 * 1024 * 1024, vmem_budget - 4 * 1024 * 1024)
    max_thw = x_budget // (2 * tn * c_pad * itemsize)

    if hw_eff <= max_thw:
        thw = hw_eff                             # one contiguous slab per N-tile
    else:
        thw = max(128, (max_thw // 128) * 128)
        # Prefer a nearby 128-multiple that divides hw_eff exactly (no tail).
        cand = thw
        while cand >= max(128, (thw * 3) // 4):
            if hw_eff % cand == 0:
                thw = cand
                break
            cand -= 128

    n_tiles = (N + tn - 1) // tn
    hw_tiles = (hw_eff + thw - 1) // thw

    x_block_bytes = tn * c_pad * thw * itemsize
    # Deepen the x pipeline only when blocks are small and the spatial axis is
    # actually tiled (covers DMA issue latency on v5e without hurting v6e/v7x).
    buffers = 3 if (hw_tiles >= 3 and x_block_bytes <= 256 * 1024) else 2

    fixed_bytes = (2 * c_pad * max(E, 128) * 4            # w (double-buffered)
                   + 2 * max(tn, 8) * max(E, 128) * 4     # out block
                   + tn * c_pad * 4                       # accumulator
                   + 2 * 1024 * 1024)                     # compiler headroom
    vmem_limit = int(min(vmem_budget,
                         max(8 * 1024 * 1024, buffers * x_block_bytes + fixed_bytes)))

    cost = pl.CostEstimate(
        flops=N * C * HW + 2 * N * c_eff * E,
        transcendentals=N * E,
        bytes_accessed=N * C * HW * itemsize + (c_eff * E + E + N * E) * 4,
    )

    kernel = functools.partial(_route_func_kernel, hw_eff=hw_eff, thw=thw,
                               hw_tiles=int(hw_tiles), lane_chunk=lane_chunk)

    x_index_map = lambda i, j: (i, 0, j)
    if buffers == 2:
        x_spec = pl.BlockSpec((tn, c_eff, thw), x_index_map)
    else:
        x_spec = pl.BlockSpec((tn, c_eff, thw), x_index_map,
                              pipeline_mode=pl.Buffered(buffers))

    out = pl.pallas_call(
        kernel,
        out_shape=jax.ShapeDtypeStruct((N, E), x.dtype),
        grid_spec=pltpu.PrefetchScalarGridSpec(
            num_scalar_prefetch=0,
            grid=(n_tiles, hw_tiles),                    # reduction axis last
            in_specs=[
                x_spec,
                pl.BlockSpec((c_eff, E), lambda i, j: (0, 0)),
                pl.BlockSpec((1, E), lambda i, j: (0, 0)),
            ],
            out_specs=pl.BlockSpec((tn, E), lambda i, j: (i, 0)),
            scratch_shapes=[pltpu.VMEM((tn, c_eff), jnp.float32)],
        ),
        compiler_params=pltpu.CompilerParams(
            dimension_semantics=("parallel", "arbitrary"),
            vmem_limit_bytes=vmem_limit,
        ),
        cost_estimate=cost,
    )(x_flat, w_fold, b2)
    return out


def _reference(x, w, b):
    pooled = jnp.mean(x, axis=(2, 3))          # AdaptiveAvgPool2d(1) + view
    return jax.nn.sigmoid(pooled @ w.T + b)    # Linear + Sigmoid


if __name__ == "__main__":
    in_channels = 4
    num_experts = 8
    N, H, W = 2, 16, 16

    key = jax.random.PRNGKey(0)
    kx, kw, kb = jax.random.split(key, 3)

    x = jax.random.normal(kx, (N, in_channels, H, W), dtype=jnp.float32)

    # Deterministic Linear init (PyTorch-style uniform bound = 1/sqrt(fan_in))
    bound = 1.0 / (in_channels ** 0.5)
    w = jax.random.uniform(kw, (num_experts, in_channels),
                           minval=-bound, maxval=bound, dtype=jnp.float32)
    b = jax.random.uniform(kb, (num_experts,),
                           minval=-bound, maxval=bound, dtype=jnp.float32)

    out = route_func_forward(x, w, b)
    out = jax.block_until_ready(out)

    ref = _reference(x, w, b)
    assert out.shape == (N, num_experts)
    assert jnp.allclose(out, ref, atol=1e-5, rtol=1e-5), (out, ref)
    print("KERNEL_OK")
</pallas_src>

<mosaic_0001>
module attributes {stable_mosaic.version = 11 : i64} {
  func.func @_route_func_kernel(%arg0: i32, %arg1: i32, %arg2: memref<2x8x128xf32, #tpu.memory_space<vmem>>, %arg3: memref<8x8xf32, #tpu.memory_space<vmem>>, %arg4: memref<1x8xf32, #tpu.memory_space<vmem>>, %arg5: memref<2x8xf32, #tpu.memory_space<vmem>>, %arg6: memref<2x8xf32, #tpu.memory_space<vmem>>) attributes {dimension_semantics = [#tpu.dimension_semantics<parallel>, #tpu.dimension_semantics<arbitrary>], iteration_bounds = array<i64: 1, 1>, scalar_prefetch = 0 : i64, scratch_operands = 1 : i64, tpu.core_type = #tpu.core_type<tc>, window_params = [{transform_indices = @transform_0, window_bounds = array<i64: 2, 8, 128>}, {pipeline_mode = #tpu.pipeline_mode<synchronous>, transform_indices = @transform_1, window_bounds = array<i64: 8, 8>}, {pipeline_mode = #tpu.pipeline_mode<synchronous>, transform_indices = @transform_2, window_bounds = array<i64: 1, 8>}, {transform_indices = @transform_3, window_bounds = array<i64: 2, 8>}]} {
    %c0_i32 = arith.constant 0 : i32
    %0 = arith.cmpi eq, %arg1, %c0_i32 : i32
    %1 = arith.extui %0 : i1 to i32
    %c0_i32_0 = arith.constant 0 : i32
    %2 = arith.cmpi ne, %1, %c0_i32_0 : i32
    scf.if %2 {
      %cst_9 = arith.constant 0.000000e+00 : f32
      %11 = vector.broadcast %cst_9 : f32 to vector<2x8xf32>
      %c0_10 = arith.constant 0 : index
      %c0_11 = arith.constant 0 : index
      %12 = vector.load %arg6[%c0_10, %c0_11] : memref<2x8xf32, #tpu.memory_space<vmem>>, vector<2x8xf32>
      tpu.vector_store %arg6[%c0_10, %c0_11], %11 {strides = array<i32>} : memref<2x8xf32, #tpu.memory_space<vmem>>, vector<2x8xf32>,
    } else {
    }
    %c0 = arith.constant 0 : index
    %c0_1 = arith.constant 0 : index
    %c0_2 = arith.constant 0 : index
    %3 = vector.load %arg2[%c0, %c0_1, %c0_2] : memref<2x8x128xf32, #tpu.memory_space<vmem>>, vector<2x8x128xf32>
    %c0_3 = arith.constant 0 : index
    %c0_4 = arith.constant 0 : index
    %4 = vector.load %arg6[%c0_3, %c0_4] : memref<2x8xf32, #tpu.memory_space<vmem>>, vector<2x8xf32>
    %cst = arith.constant dense<0.000000e+00> : vector<2x8xf32>
    %5 = vector.multi_reduction <add>, %3, %cst [2] : vector<2x8x128xf32> to vector<2x8xf32>
    %6 = arith.addf %4, %5 : vector<2x8xf32>
    %c0_5 = arith.constant 0 : index
    %c0_6 = arith.constant 0 : index
    %7 = vector.load %arg6[%c0_5, %c0_6] : memref<2x8xf32, #tpu.memory_space<vmem>>, vector<2x8xf32>
    tpu.vector_store %arg6[%c0_5, %c0_6], %6 {strides = array<i32>} : memref<2x8xf32, #tpu.memory_space<vmem>>, vector<2x8xf32>,
    %c0_i32_7 = arith.constant 0 : i32
    %8 = arith.cmpi eq, %arg1, %c0_i32_7 : i32
    %9 = arith.extui %8 : i1 to i32
    %c0_i32_8 = arith.constant 0 : i32
    %10 = arith.cmpi ne, %9, %c0_i32_8 : i32
    scf.if %10 {
      %c0_9 = arith.constant 0 : index
      %c0_10 = arith.constant 0 : index
      %11 = vector.load %arg6[%c0_9, %c0_10] : memref<2x8xf32, #tpu.memory_space<vmem>>, vector<2x8xf32>
      %c0_11 = arith.constant 0 : index
      %c0_12 = arith.constant 0 : index
      %12 = vector.load %arg3[%c0_11, %c0_12] : memref<8x8xf32, #tpu.memory_space<vmem>>, vector<8x8xf32>
      %cst_13 = arith.constant dense<0.000000e+00> : vector<2x8xf32>
      %13 = tpu.matmul %11, %12, %cst_13 {dimension_numbers = #tpu.dot_dimension_numbers<[1], [0], [0], [1], [0, 0, 1, 1], [], []>} : vector<2x8xf32>, vector<8x8xf32>, vector<2x8xf32> -> vector<2x8xf32>
      %c0_14 = arith.constant 0 : index
      %c0_15 = arith.constant 0 : index
      %14 = vector.load %arg4[%c0_14, %c0_15] : memref<1x8xf32, #tpu.memory_space<vmem>>, vector<1x8xf32>
      %15 = vector.broadcast %14 : vector<1x8xf32> to vector<2x8xf32>
      %16 = arith.addf %13, %15 : vector<2x8xf32>
      %17 = arith.negf %16 : vector<2x8xf32>
      %18 = math.exp %17 : vector<2x8xf32>
      %cst_16 = arith.constant 1.000000e+00 : f32
      %19 = vector.broadcast %cst_16 : f32 to vector<2x8xf32>
      %20 = arith.addf %19, %18 : vector<2x8xf32>
      %21 = arith.divf %19, %20 : vector<2x8xf32>
      %c0_17 = arith.constant 0 : index
      %c0_18 = arith.constant 0 : index
      %22 = vector.load %arg5[%c0_17, %c0_18] : memref<2x8xf32, #tpu.memory_space<vmem>>, vector<2x8xf32>
      tpu.vector_store %arg5[%c0_17, %c0_18], %21 {strides = array<i32>} : memref<2x8xf32, #tpu.memory_space<vmem>>, vector<2x8xf32>,
    } else {
    }
    return
  }
  func.func @transform_0(%arg0: i32, %arg1: i32) -> (i32, i32, i32) {
    %c0_i32 = arith.constant 0 : i32
    %c0_i32_0 = arith.constant 0 : i32
    return %arg0, %c0_i32, %arg1 : i32, i32, i32
  }
  func.func @transform_1(%arg0: i32, %arg1: i32) -> (i32, i32) {
    %c0_i32 = arith.constant 0 : i32
    %c0_i32_0 = arith.constant 0 : i32
    %c0_i32_1 = arith.constant 0 : i32
    return %c0_i32, %c0_i32_0 : i32, i32
  }
  func.func @transform_2(%arg0: i32, %arg1: i32) -> (i32, i32) {
    %c0_i32 = arith.constant 0 : i32
    %c0_i32_0 = arith.constant 0 : i32
    %c0_i32_1 = arith.constant 0 : i32
    return %c0_i32, %c0_i32_0 : i32, i32
  }
  func.func @transform_3(%arg0: i32, %arg1: i32) -> (i32, i32) {
    %c0_i32 = arith.constant 0 : i32
    %c0_i32_0 = arith.constant 0 : i32
    return %arg0, %c0_i32 : i32, i32
  }
}

</mosaic_0001>

<llo_original>
// kernel: tpu_custom_call.1
$region0: #{tpu_custom_call.1}
  #allocation0 [shape = 'u32[]', space=smem, size = 0x4, offset = 0x4, fixed_abs, tag = 'smem constant byte address 0x4 - core index']
  #allocation1 [shape = 'u32[72,128]{1,0:T(1,128)}', space=vmem, size = 0x9000, scoped, tag = 'internal scratch']
  #allocation2 [shape = 'f32[2,8]{1,0:T(2,128)}', space=vmem, size = 0x400, scoped, tag = 'scratch operand']
  %s0 = inlined_call_operand.hbm [shape: f32[2,8,128], index: 0, kind: input, shape index: {}]
  %s1 = inlined_call_operand.hbm [shape: f32[8,8], index: 1, kind: input, shape index: {}]
  %s2 = inlined_call_operand.vmem [shape: f32[1,8], index: 2, kind: input, shape index: {}]
  %s3 = inlined_call_operand.hbm [shape: f32[2,8], index: 3, kind: output, shape index: {}]
  %s4 = sld [smem:[#allocation0]]
  $region38: #{tpu_custom_call.1} parent=0
    _
  %s6 = ssub.s32 1, %s4
  %s7 = scalar_select 0, %s6, %s4
  $region1: #{tpu_custom_call.1} parent=0
    #allocation3 [shape = 'u8[8192]{0}', space=vmem, size = 0x2000, scoped, tag = 'input window, operand 0, single buffered']
    #allocation4 [shape = 's32[1]{0}', space=sflag, size = 0x4, scoped, tag = 'scoped memory for tpu_custom_call.1']
    #allocation5 [shape = 's32[1]{0}', space=sflag, size = 0x4, scoped, tag = 'scoped memory for tpu_custom_call.1']
    #allocation6 [shape = 'u8[4096]{0}', space=vmem, size = 0x1000, scoped, tag = 'input window, operand 1, single buffered']
    #allocation7 [shape = 's32[1]{0}', space=sflag, size = 0x4, scoped, tag = 'scoped memory for tpu_custom_call.1']
    #allocation8 [shape = 'u8[1024]{0}', space=vmem, size = 0x400, scoped, tag = 'output window, operand 0, single buffered']
    %8 = vsyncpa [#allocation4], 0
    %9 = vsyncpa [#allocation7], 0
    %10 = vsyncpa [#allocation5], 0
    // Predicated region
    $region2: #{tpu_custom_call.1} parent=1 // pred_check
      _
    $region3: #{tpu_custom_call.1} parent=1 // pred_check_branch
      %12 = sbr.rel (0) target = $region5
    $region4: #{tpu_custom_call.1} parent=1 // pred_region
      %14 = vsyncadd [#allocation4], 0
      %s15 = sshll.u32 %s0, 4
      %s16 = int_to_ptr.hbm [resolvable:$true] %s15
      %s17 = sshll.u32 [#allocation3], 4
      %s18 = int_to_ptr.vmem [resolvable:$true] %s17
      %23 = dma.hbm_to_vmem [thread:$0]  %s16, 256, %s18, [#allocation4], 128, 128, 8
    $region5: #{tpu_custom_call.1} parent=1 // pred_fallthru
      _
    // Predicated region
    $region6: #{tpu_custom_call.1} parent=1 // pred_check
      _
    $region7: #{tpu_custom_call.1} parent=1 // pred_check_branch
      %25 = sbr.rel (0) target = $region9
    $region8: #{tpu_custom_call.1} parent=1 // pred_region
      %27 = vsyncadd [#allocation7], 0
      %s29 = sshll.u32 %s1, 4
      %s30 = int_to_ptr.hbm [resolvable:$true] %s29
      %s31 = sshll.u32 [#allocation6], 4
      %s32 = int_to_ptr.vmem [resolvable:$true] %s31
      %34 = dma.hbm_to_vmem [thread:$0]  %s30, 128, %s32, [#allocation7]
    $region9: #{tpu_custom_call.1} parent=1 // pred_fallthru
      _
    // Predicated region
    $region10: #{tpu_custom_call.1} parent=1 // pred_check
      _
    $region11: #{tpu_custom_call.1} parent=1 // pred_check_branch
      %36 = sbr.rel (0) target = $region13
    $region12: #{tpu_custom_call.1} parent=1 // pred_region
      _
    $region13: #{tpu_custom_call.1} parent=1 // pred_fallthru
      _
    // Predicated region
    $region14: #{tpu_custom_call.1} parent=1 // pred_check
      _
    $region15: #{tpu_custom_call.1} parent=1 // pred_check_branch
      %38 = sbr.rel (0) target = $region17
    $region16: #{tpu_custom_call.1} parent=1 // pred_region
      %40 = dma.done [#allocation4], 256
    $region17: #{tpu_custom_call.1} parent=1 // pred_fallthru
      _
    // Predicated region
    $region18: #{tpu_custom_call.1} parent=1 // pred_check
      _
    $region19: #{tpu_custom_call.1} parent=1 // pred_check_branch
      %42 = sbr.rel (0) target = $region21
    $region20: #{tpu_custom_call.1} parent=1 // pred_region
      %44 = dma.done [#allocation7], 128
    $region21: #{tpu_custom_call.1} parent=1 // pred_fallthru
      _
    %p45 = scmp.eq.s32.totalorder 0, 0
    // Predicated region
    $region22: #{tpu_custom_call.1} parent=1 // pred_check
      %p46 = pneg %p45
    $region23: #{tpu_custom_call.1} parent=1 // pred_check_branch
      %48 = sbr.rel (%p46) target = $region25
    $region24: #{tpu_custom_call.1} parent=1 // pred_region
      %vm49 = vcmask 58368
      %50 = vst.msk [vmem:[#allocation2] sm:$0x3] %vm49, 0.0
    $region25: #{tpu_custom_call.1} parent=1 // pred_fallthru
      _
    %v51 = vld [vmem:[#allocation3] sm:$0xff]
    %v52 = vld [vmem:[#allocation3 + $0x8] sm:$0xff]
    %v53 = vld [vmem:[#allocation2] sm:$0x3]
    %54 = vadd.xlane.f32.xlu0 %v51
    %v55 = vpop.xlane.xlu0 %54
    %56 = vadd.xlane.f32.xlu0 %v52
    %v57 = vpop.xlane.xlu0 %56
    %v60 = vlaneseq
    %v61 = vand.u32 %v60, 127
    %v62 = vperm.slane %v55, %v61
    %v63 = vperm.slane %v57, %v61
    %vm64 = vcmask 1041409
    %v65 = vsel %vm64, %v63, %v62
    %v67 = vadd.f32 %v53, %v65
    %vm68 = vcmask 58368
    %69 = vst.msk [vmem:[#allocation2] sm:$0x3] %vm68, %v67
    // Predicated region
    $region26: #{tpu_custom_call.1} parent=1 // pred_check
      %p70 = pneg %p45
    $region27: #{tpu_custom_call.1} parent=1 // pred_check_branch
      %72 = sbr.rel (%p70) target = $region29
    $region28: #{tpu_custom_call.1} parent=1 // pred_region
      %v73 = vld [vmem:[#allocation2] sm:$0x3]
      %v74 = vld [vmem:[#allocation6] sm:$0xff]
      %v75 = vld [vmem:[%s2] sm:$0x1]
      %v77 = vperm.slane %v75, 0
      %vm79 = vcmask 64512
      %v81 = vsel %vm79, %v73, 0
      %83 = vmatpush.msra.mxu0 0.0
      %84 = vmatpush.msra.mxu0 0.0
      %85 = vmatpush.msra.mxu0 0.0
      %86 = vmatpush.msra.mxu0 0.0
      %87 = vmatpush.msra.mxu0 0.0
      %88 = vmatpush.msra.mxu0 0.0
      %89 = vmatpush.msra.mxu0 0.0
      %90 = vmatpush.msra.mxu0 0.0
      %91 = vmatpush.msra.mxu0 0.0
      %92 = vmatpush.msra.mxu0 0.0
      %93 = vmatpush.msra.mxu0 0.0
      %94 = vmatpush.msra.mxu0 0.0
      %95 = vmatpush.msra.mxu0 0.0
      %96 = vmatpush.msra.mxu0 0.0
      %97 = vmatpush.msra.mxu0 0.0
      %98 = vmatpush.msra.mxu0 %v74
      %99 = vmatmul.f32.gmra.mxu0 %v81
      %v100 = vpop.f32.mrf.mxu0
      %v101 = vadd.f32 %v77, %v100
      %102 = vdwg.mxu0
      %v103 = vxor.u32 %v101, 2147483648
      %v104 = vmul.f32 %v103, 1.442695
      %v105 = vpow.pop %v104
      %v106 = vadd.f32 %v105, 1.0
      %v107 = vrcp.pop %v106
      %v108 = vmul.f32 %v106, %v107
      %v109 = vsub.f32 1.0, %v108
      %v110 = vmul.f32 %v107, %v109
      %v111 = vadd.f32 %v107, %v110
      %vm112 = vweird.f32 %v106
      %vm113 = vweird.f32 %v107
      %vm114 = vmor %vm112, %vm113
      %v115 = vsel %vm114, %v107, %v111
      %v116 = vand.u32 2147483647, %v106
      %vm117 = vcmp.eq.f32.partialorder %v116, 8.507059e+37
      %v118 = vand.u32 %v106, 2147483648
      %v119 = vor.u32 1.1754944e-38, %v118
      %v120 = vsel %vm117, %v119, %v115
      %v121 = vmul.f32 1.0, %v120
      %122 = vst.msk [vmem:[#allocation8] sm:$0x3] %vm68, %v121
    $region29: #{tpu_custom_call.1} parent=1 // pred_fallthru
      _
    // Predicated region
    $region30: #{tpu_custom_call.1} parent=1 // pred_check
      _
    $region31: #{tpu_custom_call.1} parent=1 // pred_check_branch
      %124 = sbr.rel (0) target = $region33
    $region32: #{tpu_custom_call.1} parent=1 // pred_region
      %126 = vsyncadd [#allocation5], 0
      %s128 = sshll.u32 [#allocation8], 4
      %s129 = int_to_ptr.vmem [resolvable:$true] %s128
      %s130 = sshll.u32 %s3, 4
      %s131 = int_to_ptr.hbm [resolvable:$true] %s130
      %133 = dma.vmem_to_hbm [thread:$0]  %s129, 32, %s131, [#allocation5]
    $region33: #{tpu_custom_call.1} parent=1 // pred_fallthru
      _
    // Predicated region
    $region34: #{tpu_custom_call.1} parent=1 // pred_check
      _
    $region35: #{tpu_custom_call.1} parent=1 // pred_check_branch
      %135 = sbr.rel (0) target = $region37
    $region36: #{tpu_custom_call.1} parent=1 // pred_region
      %137 = dma.done [#allocation5], 32
    $region37: #{tpu_custom_call.1} parent=1 // pred_fallthru
      _
    %138 = vsyncpa [#allocation4], 1
    %139 = vsyncpa [#allocation7], 1
    %140 = vsyncpa [#allocation5], 1

</llo_original>
